<compile_context>
chip_gen: v7x
topology: tpu7x:2x2x1
jax: 0.10.0
libtpu: 0.0.40
codegen_flags: <defaults>
</compile_context>

<pallas_src>
from functools import partial

import jax
import jax.numpy as jnp
from jax import lax
from jax.experimental import pallas as pl
from jax.experimental.pallas import tpu as pltpu

NEG_SLOPE = 0.2  # PyG GATConv default leaky_relu negative_slope


# ---------------------------------------------------------------------------
# Kernels
# ---------------------------------------------------------------------------
def gat_layer1_kernel(xs_ref, xd_ref, adj_ref, w1_ref, w1a1d_ref, a1sw_ref,
                      hmask_ref, b1_ref, h1_ref, *, heads1):
    """GATConv(F_in -> d1, heads=heads1, concat=True) + bias + fused ReLU.

    One destination-node tile per grid step; all source nodes resident.
    """
    xs = xs_ref[...]                                          # (N, F) all sources
    adj_f = adj_ref[...].astype(jnp.float32)                  # (T, N) bf16 -> f32
    neg = jnp.where(adj_f > 0.0, jnp.float32(0.0), jnp.float32(-1e30))

    # Source features for all nodes (needed by the aggregation).
    h = jnp.dot(xs, w1_ref[...], preferred_element_type=jnp.float32)     # (N, H*d1)
    # Folded score projections: contract over F_in, not heads*d1.
    alpha_dst = jnp.dot(xd_ref[...], w1a1d_ref[...],
                        preferred_element_type=jnp.float32)              # (T, H)
    alpha_src = lax.dot_general(a1sw_ref[...], xs, (((1,), (1,)), ((), ())),
                                preferred_element_type=jnp.float32)      # (H, N)

    hmask = hmask_ref[...]                                    # (H, H*d1) head-col mask
    acc = None
    # TODO(synk): switch to lax.fori_loop over heads (pl.ds slices) if heads/N grow.
    for hd in range(heads1):  # static python loop, heads1 is tiny
        s = alpha_dst[:, hd:hd + 1] + alpha_src[hd:hd + 1, :]             # (T, N)
        e = jnp.maximum(s, NEG_SLOPE * s) + neg                           # LeakyReLU + mask
        e = e - jnp.max(e, axis=-1, keepdims=True)
        p = jnp.exp(e)                                                    # unnormalized
        inv = pl.reciprocal(jnp.sum(p, axis=-1, keepdims=True))           # (T, 1), exact
        # Full-width aggregation (same MXU passes as the d1-wide slice for
        # heads*d1 <= 128); normalization folded in; masked to this head's cols.
        contrib = jnp.dot(p, h, preferred_element_type=jnp.float32)       # (T, H*d1)
        contrib = contrib * (inv * hmask[hd:hd + 1, :])
        acc = contrib if acc is None else acc + contrib

    # Bias + F.relu fused; one full-width lane-dense store per tile.
    h1_ref[...] = jnp.maximum(acc + b1_ref[...], 0.0)


def gat_layer2_kernel(h1s_ref, h1d_ref, adj_ref, w2_ref, w2a2d_ref, a2sw_ref,
                      b2_ref, out_ref, *, heads2, d2p):
    """GATConv(heads1*d1 -> d2, heads=heads2, concat=False(mean)) + bias."""
    h1 = h1s_ref[...]                                         # (N, hcat) all sources
    adj_f = adj_ref[...].astype(jnp.float32)                  # (T, N)
    neg = jnp.where(adj_f > 0.0, jnp.float32(0.0), jnp.float32(-1e30))

    h2 = jnp.dot(h1, w2_ref[...], preferred_element_type=jnp.float32)     # (N, heads2*d2p)
    alpha_dst = jnp.dot(h1d_ref[...], w2a2d_ref[...],
                        preferred_element_type=jnp.float32)               # (T, heads2)
    alpha_src = lax.dot_general(a2sw_ref[...], h1, (((1,), (1,)), ((), ())),
                                preferred_element_type=jnp.float32)       # (heads2, N)

    acc = None
    for hd in range(heads2):  # heads2 == 1 in this model
        s = alpha_dst[:, hd:hd + 1] + alpha_src[hd:hd + 1, :]
        e = jnp.maximum(s, NEG_SLOPE * s) + neg
        e = e - jnp.max(e, axis=-1, keepdims=True)
        p = jnp.exp(e)
        inv = pl.reciprocal(jnp.sum(p, axis=-1, keepdims=True))
        contrib = jnp.dot(p, h2[:, hd * d2p:(hd + 1) * d2p],
                          preferred_element_type=jnp.float32) * inv        # norm folded
        acc = contrib if acc is None else acc + contrib

    out = acc * jnp.float32(1.0 / heads2) + b2_ref[...]        # head mean + bias
    out_ref[...] = out.astype(out_ref.dtype)                   # lane-dense full store


# ---------------------------------------------------------------------------
# Host-side helpers / wrapper
# ---------------------------------------------------------------------------
def _round_up(v, m):
    return ((v + m - 1) // m) * m


def _pick_tile(n):
    for t in (256, 128, 64, 32, 16, 8):
        if n % t == 0:
            return t
    return n


def gat_model(x, adj, params, *, heads1, d1, heads2, d2, tile_n=None):
    w1, a1s, a1d, b1, w2, a2s, a2d, b2 = params
    n, f_in = x.shape
    hcat = heads1 * d1
    in2 = w2.shape[0]

    if tile_n is None:
        tile_n = min(_pick_tile(n), n)
    grid = (n // tile_n,)
    nt = grid[0]

    # Adjacency streamed as bf16 (lossless for a 0/1 mask, halves HBM traffic).
    adj_bf = adj.astype(jnp.bfloat16)

    # ---- layer-1 weight folds (built once on the host) ----
    w1h = w1.reshape(f_in, heads1, d1)
    w1a1d = jnp.einsum('fhd,hd->fh', w1h, a1d)         # (F, H): alpha_dst = x @ w1a1d
    a1s_w = jnp.einsum('fhd,hd->hf', w1h, a1s)         # (H, F): alpha_src = a1s_w @ x.T
    hmask = jnp.repeat(jnp.eye(heads1, dtype=jnp.float32), d1, axis=1)   # (H, hcat)

    # ---- layer-2 params padded to a lane-dense 128-wide output ----
    d2p = _round_up(max(d2, 1), 128)
    pad = d2p - d2
    w2p = jnp.pad(w2.reshape(in2, heads2, d2), ((0, 0), (0, 0), (0, pad)))
    w2p = w2p.reshape(in2, heads2 * d2p)
    a2s_p = jnp.pad(a2s, ((0, 0), (0, pad)))
    a2d_p = jnp.pad(a2d, ((0, 0), (0, pad)))
    b2p = jnp.pad(b2, ((0, 0), (0, pad)))
    w2ph = w2p.reshape(in2, heads2, d2p)
    w2a2d = jnp.einsum('fhd,hd->fh', w2ph, a2d_p)      # (in2, heads2)
    a2s_w = jnp.einsum('fhd,hd->hf', w2ph, a2s_p)      # (heads2, in2)

    const = lambda shape: pl.BlockSpec(shape, lambda i: (0, 0))   # resident params
    tiled = lambda shape: pl.BlockSpec(shape, lambda i: (i, 0))   # dst-node stream

    # ---------------- layer 1 ----------------
    flops1 = int(nt * (2 * n * f_in * hcat + 2 * heads1 * f_in * n)
                 + 2 * n * f_in * heads1
                 + heads1 * (2 * n * n * hcat + 10 * n * n))
    bytes1 = int(4 * x.size + 2 * n * n + 4 * n * hcat
                 + 4 * (w1.size + w1a1d.size + a1s_w.size + hmask.size + b1.size))
    h1 = pl.pallas_call(
        partial(gat_layer1_kernel, heads1=heads1),
        out_shape=jax.ShapeDtypeStruct((n, hcat), jnp.float32),
        grid=grid,
        in_specs=[
            const((n, f_in)),           # x, all source nodes (resident)
            tiled((tile_n, f_in)),      # x, destination tile
            tiled((tile_n, n)),         # adjacency tile (bf16)
            const((f_in, hcat)),        # w1
            const((f_in, heads1)),      # w1 @ a_dst fold
            const((heads1, f_in)),      # a_src @ w1.T fold
            const((heads1, hcat)),      # head column mask
            const((1, hcat)),           # bias 1
        ],
        out_specs=tiled((tile_n, hcat)),
        compiler_params=pltpu.CompilerParams(dimension_semantics=("parallel",)),
        cost_estimate=pl.CostEstimate(flops=flops1,
                                      transcendentals=int(heads1 * n * n),
                                      bytes_accessed=bytes1),
    )(x, x, adj_bf, w1, w1a1d, a1s_w, hmask, b1)

    # ---------------- layer 2 ----------------
    flops2 = int(nt * (2 * n * hcat * heads2 * d2p + 2 * heads2 * hcat * n)
                 + 2 * n * hcat * heads2
                 + heads2 * (2 * n * n * d2p + 10 * n * n))
    bytes2 = int(4 * n * hcat + 2 * n * n + 4 * n * d2p
                 + 4 * (w2p.size + w2a2d.size + a2s_w.size + b2p.size))
    out_p = pl.pallas_call(
        partial(gat_layer2_kernel, heads2=heads2, d2p=d2p),
        out_shape=jax.ShapeDtypeStruct((n, d2p), jnp.float32),
        grid=grid,
        in_specs=[
            const((n, hcat)),            # h1 (relu'd), all source nodes
            tiled((tile_n, hcat)),       # h1 destination tile
            tiled((tile_n, n)),          # adjacency tile (bf16)
            const((hcat, heads2 * d2p)), # w2 (padded)
            const((hcat, heads2)),       # w2 @ a_dst fold
            const((heads2, hcat)),       # a_src @ w2.T fold
            const((1, d2p)),             # bias 2 (padded)
        ],
        out_specs=tiled((tile_n, d2p)),
        compiler_params=pltpu.CompilerParams(dimension_semantics=("parallel",)),
        cost_estimate=pl.CostEstimate(flops=flops2,
                                      transcendentals=int(heads2 * n * n),
                                      bytes_accessed=bytes2),
    )(h1, h1, adj_bf, w2p, w2a2d, a2s_w, b2p)
    return out_p[:, :d2]


# ---------------------------------------------------------------------------
# Pure-JAX reference (independent math) for correctness check
# ---------------------------------------------------------------------------
def _gat_layer_ref(h_in, adj, w, a_src, a_dst, bias, heads, d_out, concat):
    h = jnp.dot(h_in, w)
    outs = []
    for hd in range(heads):
        hh = h[:, hd * d_out:(hd + 1) * d_out]
        asrc = jnp.sum(hh * a_src[hd:hd + 1, :], axis=-1, keepdims=True)
        adst = jnp.sum(hh * a_dst[hd:hd + 1, :], axis=-1, keepdims=True)
        e = adst + asrc.T
        e = jnp.where(e >= 0, e, NEG_SLOPE * e)
        e = jnp.where(adj > 0, e, jnp.float32(-1e30))
        e = e - jnp.max(e, axis=-1, keepdims=True)
        p = jnp.exp(e) * adj
        denom = jnp.maximum(jnp.sum(p, axis=-1, keepdims=True), 1e-16)
        p = p / denom
        outs.append(jnp.dot(p, hh))
    if concat:
        out = jnp.concatenate(outs, axis=-1)
    else:
        out = sum(outs) / jnp.float32(heads)
    return out + bias


def gat_model_ref(x, adj, params, *, heads1, d1, heads2, d2):
    w1, a1s, a1d, b1, w2, a2s, a2d, b2 = params
    h = _gat_layer_ref(x, adj, w1, a1s, a1d, b1, heads1, d1, concat=True)
    h = jnp.maximum(h, 0.0)
    return _gat_layer_ref(h, adj, w2, a2s, a2d, b2, heads2, d2, concat=False)


# ---------------------------------------------------------------------------
if __name__ == "__main__":
    # Small shapes consistent with the module: input_dim=8, hidden_dim=8,
    # num_heads=4, output_dim=4, N=16 nodes.
    N, input_dim, hidden_dim, num_heads, output_dim = 16, 8, 8, 4, 4

    key = jax.random.PRNGKey(0)
    kx, kadj, k1, k2, k3, k4, k5, k6, k7, k8 = jax.random.split(key, 10)

    # Node features (N, input_dim)
    x = jax.random.normal(kx, (N, input_dim), dtype=jnp.float32)

    # Deterministic random graph + self-loops (PyG GATConv adds self-loops;
    # the kernel's masked softmax relies on every dst row having an edge).
    adj = jax.random.bernoulli(kadj, 0.3, (N, N)).astype(jnp.float32)
    adj = jnp.maximum(adj, jnp.eye(N, dtype=jnp.float32))  # adj[dst, src]

    # Layer-1 params: GATConv(input_dim, hidden_dim, heads=4, concat=True)
    s1 = 1.0 / jnp.sqrt(jnp.float32(input_dim))
    w1 = jax.random.normal(k1, (input_dim, num_heads * hidden_dim), jnp.float32) * s1
    a1_src = jax.random.normal(k2, (num_heads, hidden_dim), jnp.float32) * 0.1
    a1_dst = jax.random.normal(k3, (num_heads, hidden_dim), jnp.float32) * 0.1
    b1 = jax.random.normal(k7, (1, num_heads * hidden_dim), jnp.float32) * 0.01

    # Layer-2 params: GATConv(hidden_dim*heads, output_dim, heads=1, concat=False)
    in2 = num_heads * hidden_dim
    s2 = 1.0 / jnp.sqrt(jnp.float32(in2))
    w2 = jax.random.normal(k4, (in2, output_dim), jnp.float32) * s2
    a2_src = jax.random.normal(k5, (1, output_dim), jnp.float32) * 0.1
    a2_dst = jax.random.normal(k6, (1, output_dim), jnp.float32) * 0.1
    b2 = jax.random.normal(k8, (1, output_dim), jnp.float32) * 0.01

    params = (w1, a1_src, a1_dst, b1, w2, a2_src, a2_dst, b2)

    out = gat_model(x, adj, params,
                    heads1=num_heads, d1=hidden_dim, heads2=1, d2=output_dim)
    out = jax.block_until_ready(out)

    ref = gat_model_ref(x, adj, params,
                        heads1=num_heads, d1=hidden_dim, heads2=1, d2=output_dim)
    assert out.shape == (N, output_dim)
    assert jnp.allclose(out, ref, atol=1e-4, rtol=1e-4), "mismatch vs JAX reference"

    print("KERNEL_OK")
</pallas_src>

<mosaic_0001>
module attributes {stable_mosaic.version = 11 : i64} {
  func.func @gat_layer1_kernel(%arg0: i32, %arg1: memref<16x8xf32, #tpu.memory_space<vmem>>, %arg2: memref<16x8xf32, #tpu.memory_space<vmem>>, %arg3: memref<16x16xbf16, #tpu.memory_space<vmem>>, %arg4: memref<8x32xf32, #tpu.memory_space<vmem>>, %arg5: memref<8x4xf32, #tpu.memory_space<vmem>>, %arg6: memref<4x8xf32, #tpu.memory_space<vmem>>, %arg7: memref<4x32xf32, #tpu.memory_space<vmem>>, %arg8: memref<1x32xf32, #tpu.memory_space<vmem>>, %arg9: memref<16x32xf32, #tpu.memory_space<vmem>>) attributes {dimension_semantics = [#tpu.dimension_semantics<parallel>], iteration_bounds = array<i64: 1>, scalar_prefetch = 0 : i64, scratch_operands = 0 : i64, tpu.core_type = #tpu.core_type<tc>, window_params = [{pipeline_mode = #tpu.pipeline_mode<synchronous>, transform_indices = @transform_0, window_bounds = array<i64: 16, 8>}, {transform_indices = @transform_1, window_bounds = array<i64: 16, 8>}, {transform_indices = @transform_2, window_bounds = array<i64: 16, 16>}, {pipeline_mode = #tpu.pipeline_mode<synchronous>, transform_indices = @transform_3, window_bounds = array<i64: 8, 32>}, {pipeline_mode = #tpu.pipeline_mode<synchronous>, transform_indices = @transform_4, window_bounds = array<i64: 8, 4>}, {pipeline_mode = #tpu.pipeline_mode<synchronous>, transform_indices = @transform_5, window_bounds = array<i64: 4, 8>}, {pipeline_mode = #tpu.pipeline_mode<synchronous>, transform_indices = @transform_6, window_bounds = array<i64: 4, 32>}, {pipeline_mode = #tpu.pipeline_mode<synchronous>, transform_indices = @transform_7, window_bounds = array<i64: 1, 32>}, {transform_indices = @transform_8, window_bounds = array<i64: 16, 32>}]} {
    %c0 = arith.constant 0 : index
    %c0_0 = arith.constant 0 : index
    %0 = vector.load %arg1[%c0, %c0_0] : memref<16x8xf32, #tpu.memory_space<vmem>>, vector<16x8xf32>
    %c0_1 = arith.constant 0 : index
    %c0_2 = arith.constant 0 : index
    %1 = vector.load %arg3[%c0_1, %c0_2] : memref<16x16xbf16, #tpu.memory_space<vmem>>, vector<16x16xbf16>
    %2 = arith.extf %1 : vector<16x16xbf16> to vector<16x16xf32>
    %cst = arith.constant 0.000000e+00 : f32
    %3 = vector.broadcast %cst : f32 to vector<16x16xf32>
    %4 = arith.cmpf ogt, %2, %3 : vector<16x16xf32>
    %cst_3 = arith.constant 0.000000e+00 : f32
    %cst_4 = arith.constant -1.000000e+30 : f32
    %5 = vector.broadcast %cst_3 : f32 to vector<16x16xf32>
    %6 = vector.broadcast %cst_4 : f32 to vector<16x16xf32>
    %7 = arith.select %4, %5, %6 : vector<16x16xi1>, vector<16x16xf32>
    %c0_5 = arith.constant 0 : index
    %c0_6 = arith.constant 0 : index
    %8 = vector.load %arg4[%c0_5, %c0_6] : memref<8x32xf32, #tpu.memory_space<vmem>>, vector<8x32xf32>
    %cst_7 = arith.constant dense<0.000000e+00> : vector<16x32xf32>
    %9 = tpu.matmul %0, %8, %cst_7 {dimension_numbers = #tpu.dot_dimension_numbers<[1], [0], [0], [1], [0, 0, 1, 1], [], []>} : vector<16x8xf32>, vector<8x32xf32>, vector<16x32xf32> -> vector<16x32xf32>
    %c0_8 = arith.constant 0 : index
    %c0_9 = arith.constant 0 : index
    %10 = vector.load %arg2[%c0_8, %c0_9] : memref<16x8xf32, #tpu.memory_space<vmem>>, vector<16x8xf32>
    %c0_10 = arith.constant 0 : index
    %c0_11 = arith.constant 0 : index
    %11 = vector.load %arg5[%c0_10, %c0_11] : memref<8x4xf32, #tpu.memory_space<vmem>>, vector<8x4xf32>
    %cst_12 = arith.constant dense<0.000000e+00> : vector<16x4xf32>
    %12 = tpu.matmul %10, %11, %cst_12 {dimension_numbers = #tpu.dot_dimension_numbers<[1], [0], [0], [1], [0, 0, 1, 1], [], []>} : vector<16x8xf32>, vector<8x4xf32>, vector<16x4xf32> -> vector<16x4xf32>
    %c0_13 = arith.constant 0 : index
    %c0_14 = arith.constant 0 : index
    %13 = vector.load %arg6[%c0_13, %c0_14] : memref<4x8xf32, #tpu.memory_space<vmem>>, vector<4x8xf32>
    %cst_15 = arith.constant dense<0.000000e+00> : vector<4x16xf32>
    %14 = tpu.matmul %13, %0, %cst_15 {dimension_numbers = #tpu.dot_dimension_numbers<[1], [1], [0], [0], [0, 0, 1, 0], [], []>} : vector<4x8xf32>, vector<16x8xf32>, vector<4x16xf32> -> vector<4x16xf32>
    %c0_16 = arith.constant 0 : index
    %c0_17 = arith.constant 0 : index
    %15 = vector.load %arg7[%c0_16, %c0_17] : memref<4x32xf32, #tpu.memory_space<vmem>>, vector<4x32xf32>
    %16 = vector.extract_strided_slice %12 {offsets = [0, 0], sizes = [16, 1], strides = [1, 1]} : vector<16x4xf32> to vector<16x1xf32>
    %17 = vector.extract_strided_slice %14 {offsets = [0, 0], sizes = [1, 16], strides = [1, 1]} : vector<4x16xf32> to vector<1x16xf32>
    %18 = vector.broadcast %16 : vector<16x1xf32> to vector<16x16xf32>
    %19 = vector.broadcast %17 : vector<1x16xf32> to vector<16x16xf32>
    %20 = arith.addf %18, %19 : vector<16x16xf32>
    %cst_18 = arith.constant 2.000000e-01 : f32
    %21 = vector.broadcast %cst_18 : f32 to vector<16x16xf32>
    %22 = arith.mulf %21, %20 : vector<16x16xf32>
    %23 = arith.maximumf %20, %22 : vector<16x16xf32>
    %24 = arith.addf %23, %7 : vector<16x16xf32>
    %cst_19 = arith.constant dense<0xFF800000> : vector<16xf32>
    %25 = vector.multi_reduction <maximumf>, %24, %cst_19 [1] : vector<16x16xf32> to vector<16xf32>
    %26 = vector.shape_cast %25 : vector<16xf32> to vector<16x1xf32>
    %27 = vector.broadcast %26 : vector<16x1xf32> to vector<16x16xf32>
    %28 = arith.subf %24, %27 : vector<16x16xf32>
    %29 = math.exp %28 : vector<16x16xf32>
    %cst_20 = arith.constant dense<0.000000e+00> : vector<16xf32>
    %30 = vector.multi_reduction <add>, %29, %cst_20 [1] : vector<16x16xf32> to vector<16xf32>
    %31 = vector.shape_cast %30 : vector<16xf32> to vector<16x1xf32>
    %32 = tpu.reciprocal %31 : vector<16x1xf32> -> vector<16x1xf32>
    %cst_21 = arith.constant dense<0.000000e+00> : vector<16x32xf32>
    %33 = tpu.matmul %29, %9, %cst_21 {dimension_numbers = #tpu.dot_dimension_numbers<[1], [0], [0], [1], [0, 0, 1, 1], [], []>} : vector<16x16xf32>, vector<16x32xf32>, vector<16x32xf32> -> vector<16x32xf32>
    %34 = vector.extract_strided_slice %15 {offsets = [0, 0], sizes = [1, 32], strides = [1, 1]} : vector<4x32xf32> to vector<1x32xf32>
    %35 = vector.broadcast %32 : vector<16x1xf32> to vector<16x32xf32>
    %36 = vector.broadcast %34 : vector<1x32xf32> to vector<16x32xf32>
    %37 = arith.mulf %35, %36 : vector<16x32xf32>
    %38 = arith.mulf %33, %37 : vector<16x32xf32>
    %39 = vector.extract_strided_slice %12 {offsets = [0, 1], sizes = [16, 1], strides = [1, 1]} : vector<16x4xf32> to vector<16x1xf32>
    %40 = vector.extract_strided_slice %14 {offsets = [1, 0], sizes = [1, 16], strides = [1, 1]} : vector<4x16xf32> to vector<1x16xf32>
    %41 = vector.broadcast %39 : vector<16x1xf32> to vector<16x16xf32>
    %42 = vector.broadcast %40 : vector<1x16xf32> to vector<16x16xf32>
    %43 = arith.addf %41, %42 : vector<16x16xf32>
    %cst_22 = arith.constant 2.000000e-01 : f32
    %44 = vector.broadcast %cst_22 : f32 to vector<16x16xf32>
    %45 = arith.mulf %44, %43 : vector<16x16xf32>
    %46 = arith.maximumf %43, %45 : vector<16x16xf32>
    %47 = arith.addf %46, %7 : vector<16x16xf32>
    %cst_23 = arith.constant dense<0xFF800000> : vector<16xf32>
    %48 = vector.multi_reduction <maximumf>, %47, %cst_23 [1] : vector<16x16xf32> to vector<16xf32>
    %49 = vector.shape_cast %48 : vector<16xf32> to vector<16x1xf32>
    %50 = vector.broadcast %49 : vector<16x1xf32> to vector<16x16xf32>
    %51 = arith.subf %47, %50 : vector<16x16xf32>
    %52 = math.exp %51 : vector<16x16xf32>
    %cst_24 = arith.constant dense<0.000000e+00> : vector<16xf32>
    %53 = vector.multi_reduction <add>, %52, %cst_24 [1] : vector<16x16xf32> to vector<16xf32>
    %54 = vector.shape_cast %53 : vector<16xf32> to vector<16x1xf32>
    %55 = tpu.reciprocal %54 : vector<16x1xf32> -> vector<16x1xf32>
    %cst_25 = arith.constant dense<0.000000e+00> : vector<16x32xf32>
    %56 = tpu.matmul %52, %9, %cst_25 {dimension_numbers = #tpu.dot_dimension_numbers<[1], [0], [0], [1], [0, 0, 1, 1], [], []>} : vector<16x16xf32>, vector<16x32xf32>, vector<16x32xf32> -> vector<16x32xf32>
    %57 = vector.extract_strided_slice %15 {offsets = [1, 0], sizes = [1, 32], strides = [1, 1]} : vector<4x32xf32> to vector<1x32xf32>
    %58 = vector.broadcast %55 : vector<16x1xf32> to vector<16x32xf32>
    %59 = vector.broadcast %57 : vector<1x32xf32> to vector<16x32xf32>
    %60 = arith.mulf %58, %59 : vector<16x32xf32>
    %61 = arith.mulf %56, %60 : vector<16x32xf32>
    %62 = arith.addf %38, %61 : vector<16x32xf32>
    %63 = vector.extract_strided_slice %12 {offsets = [0, 2], sizes = [16, 1], strides = [1, 1]} : vector<16x4xf32> to vector<16x1xf32>
    %64 = vector.extract_strided_slice %14 {offsets = [2, 0], sizes = [1, 16], strides = [1, 1]} : vector<4x16xf32> to vector<1x16xf32>
    %65 = vector.broadcast %63 : vector<16x1xf32> to vector<16x16xf32>
    %66 = vector.broadcast %64 : vector<1x16xf32> to vector<16x16xf32>
    %67 = arith.addf %65, %66 : vector<16x16xf32>
    %cst_26 = arith.constant 2.000000e-01 : f32
    %68 = vector.broadcast %cst_26 : f32 to vector<16x16xf32>
    %69 = arith.mulf %68, %67 : vector<16x16xf32>
    %70 = arith.maximumf %67, %69 : vector<16x16xf32>
    %71 = arith.addf %70, %7 : vector<16x16xf32>
    %cst_27 = arith.constant dense<0xFF800000> : vector<16xf32>
    %72 = vector.multi_reduction <maximumf>, %71, %cst_27 [1] : vector<16x16xf32> to vector<16xf32>
    %73 = vector.shape_cast %72 : vector<16xf32> to vector<16x1xf32>
    %74 = vector.broadcast %73 : vector<16x1xf32> to vector<16x16xf32>
    %75 = arith.subf %71, %74 : vector<16x16xf32>
    %76 = math.exp %75 : vector<16x16xf32>
    %cst_28 = arith.constant dense<0.000000e+00> : vector<16xf32>
    %77 = vector.multi_reduction <add>, %76, %cst_28 [1] : vector<16x16xf32> to vector<16xf32>
    %78 = vector.shape_cast %77 : vector<16xf32> to vector<16x1xf32>
    %79 = tpu.reciprocal %78 : vector<16x1xf32> -> vector<16x1xf32>
    %cst_29 = arith.constant dense<0.000000e+00> : vector<16x32xf32>
    %80 = tpu.matmul %76, %9, %cst_29 {dimension_numbers = #tpu.dot_dimension_numbers<[1], [0], [0], [1], [0, 0, 1, 1], [], []>} : vector<16x16xf32>, vector<16x32xf32>, vector<16x32xf32> -> vector<16x32xf32>
    %81 = vector.extract_strided_slice %15 {offsets = [2, 0], sizes = [1, 32], strides = [1, 1]} : vector<4x32xf32> to vector<1x32xf32>
    %82 = vector.broadcast %79 : vector<16x1xf32> to vector<16x32xf32>
    %83 = vector.broadcast %81 : vector<1x32xf32> to vector<16x32xf32>
    %84 = arith.mulf %82, %83 : vector<16x32xf32>
    %85 = arith.mulf %80, %84 : vector<16x32xf32>
    %86 = arith.addf %62, %85 : vector<16x32xf32>
    %87 = vector.extract_strided_slice %12 {offsets = [0, 3], sizes = [16, 1], strides = [1, 1]} : vector<16x4xf32> to vector<16x1xf32>
    %88 = vector.extract_strided_slice %14 {offsets = [3, 0], sizes = [1, 16], strides = [1, 1]} : vector<4x16xf32> to vector<1x16xf32>
    %89 = vector.broadcast %87 : vector<16x1xf32> to vector<16x16xf32>
    %90 = vector.broadcast %88 : vector<1x16xf32> to vector<16x16xf32>
    %91 = arith.addf %89, %90 : vector<16x16xf32>
    %cst_30 = arith.constant 2.000000e-01 : f32
    %92 = vector.broadcast %cst_30 : f32 to vector<16x16xf32>
    %93 = arith.mulf %92, %91 : vector<16x16xf32>
    %94 = arith.maximumf %91, %93 : vector<16x16xf32>
    %95 = arith.addf %94, %7 : vector<16x16xf32>
    %cst_31 = arith.constant dense<0xFF800000> : vector<16xf32>
    %96 = vector.multi_reduction <maximumf>, %95, %cst_31 [1] : vector<16x16xf32> to vector<16xf32>
    %97 = vector.shape_cast %96 : vector<16xf32> to vector<16x1xf32>
    %98 = vector.broadcast %97 : vector<16x1xf32> to vector<16x16xf32>
    %99 = arith.subf %95, %98 : vector<16x16xf32>
    %100 = math.exp %99 : vector<16x16xf32>
    %cst_32 = arith.constant dense<0.000000e+00> : vector<16xf32>
    %101 = vector.multi_reduction <add>, %100, %cst_32 [1] : vector<16x16xf32> to vector<16xf32>
    %102 = vector.shape_cast %101 : vector<16xf32> to vector<16x1xf32>
    %103 = tpu.reciprocal %102 : vector<16x1xf32> -> vector<16x1xf32>
    %cst_33 = arith.constant dense<0.000000e+00> : vector<16x32xf32>
    %104 = tpu.matmul %100, %9, %cst_33 {dimension_numbers = #tpu.dot_dimension_numbers<[1], [0], [0], [1], [0, 0, 1, 1], [], []>} : vector<16x16xf32>, vector<16x32xf32>, vector<16x32xf32> -> vector<16x32xf32>
    %105 = vector.extract_strided_slice %15 {offsets = [3, 0], sizes = [1, 32], strides = [1, 1]} : vector<4x32xf32> to vector<1x32xf32>
    %106 = vector.broadcast %103 : vector<16x1xf32> to vector<16x32xf32>
    %107 = vector.broadcast %105 : vector<1x32xf32> to vector<16x32xf32>
    %108 = arith.mulf %106, %107 : vector<16x32xf32>
    %109 = arith.mulf %104, %108 : vector<16x32xf32>
    %110 = arith.addf %86, %109 : vector<16x32xf32>
    %c0_34 = arith.constant 0 : index
    %c0_35 = arith.constant 0 : index
    %111 = vector.load %arg8[%c0_34, %c0_35] : memref<1x32xf32, #tpu.memory_space<vmem>>, vector<1x32xf32>
    %112 = vector.broadcast %111 : vector<1x32xf32> to vector<16x32xf32>
    %113 = arith.addf %110, %112 : vector<16x32xf32>
    %cst_36 = arith.constant 0.000000e+00 : f32
    %114 = vector.broadcast %cst_36 : f32 to vector<16x32xf32>
    %115 = arith.maximumf %113, %114 : vector<16x32xf32>
    %c0_37 = arith.constant 0 : index
    %c0_38 = arith.constant 0 : index
    %116 = vector.load %arg9[%c0_37, %c0_38] : memref<16x32xf32, #tpu.memory_space<vmem>>, vector<16x32xf32>
    tpu.vector_store %arg9[%c0_37, %c0_38], %115 {strides = array<i32>} : memref<16x32xf32, #tpu.memory_space<vmem>>, vector<16x32xf32>,
    return
  }
  func.func @transform_0(%arg0: i32) -> (i32, i32) {
    %c0_i32 = arith.constant 0 : i32
    %c0_i32_0 = arith.constant 0 : i32
    %c0_i32_1 = arith.constant 0 : i32
    return %c0_i32, %c0_i32_0 : i32, i32
  }
  func.func @transform_1(%arg0: i32) -> (i32, i32) {
    %c0_i32 = arith.constant 0 : i32
    %c0_i32_0 = arith.constant 0 : i32
    return %arg0, %c0_i32 : i32, i32
  }
  func.func @transform_2(%arg0: i32) -> (i32, i32) {
    %c0_i32 = arith.constant 0 : i32
    %c0_i32_0 = arith.constant 0 : i32
    return %arg0, %c0_i32 : i32, i32
  }
  func.func @transform_3(%arg0: i32) -> (i32, i32) {
    %c0_i32 = arith.constant 0 : i32
    %c0_i32_0 = arith.constant 0 : i32
    %c0_i32_1 = arith.constant 0 : i32
    return %c0_i32, %c0_i32_0 : i32, i32
  }
  func.func @transform_4(%arg0: i32) -> (i32, i32) {
    %c0_i32 = arith.constant 0 : i32
    %c0_i32_0 = arith.constant 0 : i32
    %c0_i32_1 = arith.constant 0 : i32
    return %c0_i32, %c0_i32_0 : i32, i32
  }
  func.func @transform_5(%arg0: i32) -> (i32, i32) {
    %c0_i32 = arith.constant 0 : i32
    %c0_i32_0 = arith.constant 0 : i32
    %c0_i32_1 = arith.constant 0 : i32
    return %c0_i32, %c0_i32_0 : i32, i32
  }
  func.func @transform_6(%arg0: i32) -> (i32, i32) {
    %c0_i32 = arith.constant 0 : i32
    %c0_i32_0 = arith.constant 0 : i32
    %c0_i32_1 = arith.constant 0 : i32
    return %c0_i32, %c0_i32_0 : i32, i32
  }
  func.func @transform_7(%arg0: i32) -> (i32, i32) {
    %c0_i32 = arith.constant 0 : i32
    %c0_i32_0 = arith.constant 0 : i32
    %c0_i32_1 = arith.constant 0 : i32
    return %c0_i32, %c0_i32_0 : i32, i32
  }
  func.func @transform_8(%arg0: i32) -> (i32, i32) {
    %c0_i32 = arith.constant 0 : i32
    %c0_i32_0 = arith.constant 0 : i32
    return %arg0, %c0_i32 : i32, i32
  }
}

</mosaic_0001>

<llo_original>
// kernel: tpu_custom_call.1
$region0: #{tpu_custom_call.1}
  #allocation0 [shape = 'u32[]', space=smem, size = 0x4, offset = 0x4, fixed_abs, tag = 'smem constant byte address 0x4 - core index']
  #allocation1 [shape = 'u32[144,128]{1,0:T(1,128)}', space=vmem, size = 0x12000, scoped, tag = 'internal scratch']
  %s0 = inlined_call_operand.vmem [shape: f32[16,8], index: 0, kind: input, shape index: {}]
  %s1 = inlined_call_operand.vmem [shape: f32[16,8], index: 1, kind: input, shape index: {}]
  %s2 = inlined_call_operand.vmem [shape: bf16[16,16], index: 2, kind: input, shape index: {}]
  %s3 = inlined_call_operand.vmem [shape: f32[8,32], index: 3, kind: input, shape index: {}]
  %s4 = inlined_call_operand.vmem [shape: f32[8,4], index: 4, kind: input, shape index: {}]
  %s5 = inlined_call_operand.vmem [shape: f32[4,8], index: 5, kind: input, shape index: {}]
  %s6 = inlined_call_operand.vmem [shape: f32[4,32], index: 6, kind: input, shape index: {}]
  %s7 = inlined_call_operand.vmem [shape: f32[1,32], index: 7, kind: input, shape index: {}]
  %s8 = inlined_call_operand.hbm [shape: f32[16,32], index: 8, kind: output, shape index: {}]
  %s9 = sld [smem:[#allocation0]]
  $region42: #{tpu_custom_call.1} parent=0
    _
  %s11 = ssub.s32 1, %s9
  %s12 = scalar_select 0, %s11, %s9
  $region1: #{tpu_custom_call.1} parent=0
    #allocation2 [shape = 'u8[8192]{0}', space=vmem, size = 0x2000, scoped, tag = 'output window, operand 0, single buffered']
    #allocation3 [shape = 's32[1]{0}', space=sflag, size = 0x4, scoped, tag = 'scoped memory for tpu_custom_call.1']
    %13 = vsyncpa [#allocation3], 0
    // Predicated region
    $region2: #{tpu_custom_call.1} parent=1 // pred_check
      _
    $region3: #{tpu_custom_call.1} parent=1 // pred_check_branch
      %15 = sbr.rel (0) target = $region5
    $region4: #{tpu_custom_call.1} parent=1 // pred_region
      _
    $region5: #{tpu_custom_call.1} parent=1 // pred_fallthru
      _
    // Predicated region
    $region6: #{tpu_custom_call.1} parent=1 // pred_check
      _
    $region7: #{tpu_custom_call.1} parent=1 // pred_check_branch
      %17 = sbr.rel (0) target = $region9
    $region8: #{tpu_custom_call.1} parent=1 // pred_region
      _
    $region9: #{tpu_custom_call.1} parent=1 // pred_fallthru
      _
    // Predicated region
    $region10: #{tpu_custom_call.1} parent=1 // pred_check
      _
    $region11: #{tpu_custom_call.1} parent=1 // pred_check_branch
      %19 = sbr.rel (0) target = $region13
    $region12: #{tpu_custom_call.1} parent=1 // pred_region
      _
    $region13: #{tpu_custom_call.1} parent=1 // pred_fallthru
      _
    // Predicated region
    $region14: #{tpu_custom_call.1} parent=1 // pred_check
      _
    $region15: #{tpu_custom_call.1} parent=1 // pred_check_branch
      %21 = sbr.rel (0) target = $region17
    $region16: #{tpu_custom_call.1} parent=1 // pred_region
      _
    $region17: #{tpu_custom_call.1} parent=1 // pred_fallthru
      _
    // Predicated region
    $region18: #{tpu_custom_call.1} parent=1 // pred_check
      _
    $region19: #{tpu_custom_call.1} parent=1 // pred_check_branch
      %23 = sbr.rel (0) target = $region21
    $region20: #{tpu_custom_call.1} parent=1 // pred_region
      _
    $region21: #{tpu_custom_call.1} parent=1 // pred_fallthru
      _
    // Predicated region
    $region22: #{tpu_custom_call.1} parent=1 // pred_check
      _
    $region23: #{tpu_custom_call.1} parent=1 // pred_check_branch
      %25 = sbr.rel (0) target = $region25
    $region24: #{tpu_custom_call.1} parent=1 // pred_region
      _
    $region25: #{tpu_custom_call.1} parent=1 // pred_fallthru
      _
    // Predicated region
    $region26: #{tpu_custom_call.1} parent=1 // pred_check
      _
    $region27: #{tpu_custom_call.1} parent=1 // pred_check_branch
      %27 = sbr.rel (0) target = $region29
    $region28: #{tpu_custom_call.1} parent=1 // pred_region
      _
    $region29: #{tpu_custom_call.1} parent=1 // pred_fallthru
      _
    // Predicated region
    $region30: #{tpu_custom_call.1} parent=1 // pred_check
      _
    $region31: #{tpu_custom_call.1} parent=1 // pred_check_branch
      %29 = sbr.rel (0) target = $region33
    $region32: #{tpu_custom_call.1} parent=1 // pred_region
      _
    $region33: #{tpu_custom_call.1} parent=1 // pred_fallthru
      _
    %v30 = vld [vmem:[%s0] sm:$0xff]
    %v31 = vld [vmem:[%s0 + $0x8] sm:$0xff]
    %v32 = vld [vmem:[%s2] sm:$0xf]
    %v33 = vld [vmem:[%s2 + $0x4] sm:$0xf]
    %v34 = vunpack.c.l.bf16 %v32
    %v35 = vunpack.c.l.bf16 %v33
    %vm36 = vcmp.gt.f32.partialorder %v34, 0.0
    %vm37 = vcmp.gt.f32.partialorder %v35, 0.0
    %v38 = vsel %vm36, 0.0, -1e+30
    %v39 = vsel %vm37, 0.0, -1e+30
    %v40 = vld [vmem:[%s3] sm:$0xff]
    %vm41 = vcmask 64512
    %v43 = vsel %vm41, %v30, 0
    %v46 = vsel %vm41, %v31, 0
    %48 = vmatprep.subr.mxu0 0.0
    %49 = vmatpush1.msra.mxu0 %v40
    %50 = vmatprep.subr.mxu0 0.0
    %51 = vmatpush1.msra.mxu0 0.0
    %52 = vmatprep.subr.mxu0 0.0
    %53 = vmatpush1.msra.mxu0 0.0
    %54 = vmatprep.subr.mxu0 0.0
    %55 = vmatpush1.msra.mxu0 0.0
    %56 = vmatprep.subr.mxu0 0.0
    %57 = vmatpush1.msra.mxu0 0.0
    %58 = vmatprep.subr.mxu0 0.0
    %59 = vmatpush1.msra.mxu0 0.0
    %60 = vmatprep.subr.mxu0 0.0
    %61 = vmatpush1.msra.mxu0 0.0
    %62 = vmatprep.subr.mxu0 0.0
    %63 = vmatpush1.msra.mxu0 0.0
    %64 = vmatprep.subr.mxu0 0.0
    %65 = vmatpush1.msra.mxu0 0.0
    %66 = vmatprep.subr.mxu0 0.0
    %67 = vmatpush1.msra.mxu0 0.0
    %68 = vmatprep.subr.mxu0 0.0
    %69 = vmatpush1.msra.mxu0 0.0
    %70 = vmatprep.subr.mxu0 0.0
    %71 = vmatpush1.msra.mxu0 0.0
    %72 = vmatprep.subr.mxu0 0.0
    %73 = vmatpush1.msra.mxu0 0.0
    %74 = vmatprep.subr.mxu0 0.0
    %75 = vmatpush1.msra.mxu0 0.0
    %76 = vmatprep.subr.mxu0 0.0
    %77 = vmatpush1.msra.mxu0 0.0
    %78 = vmatprep.subr.mxu0 0.0
    %79 = vmatpush1.msra.mxu0 0.0
    %80 = vmatprep.subr.mxu0 0.0
    %81 = vmatpush1.msra.mxu0 0.0
    %82 = vmatprep.subr.mxu0 0.0
    %83 = vmatpush1.msra.mxu0 0.0
    %84 = vmatprep.subr.mxu0 0.0
    %85 = vmatpush1.msra.mxu0 0.0
    %86 = vmatprep.subr.mxu0 0.0
    %87 = vmatpush1.msra.mxu0 0.0
    %88 = vmatprep.subr.mxu0 0.0
    %89 = vmatpush1.msra.mxu0 0.0
    %90 = vmatprep.subr.mxu0 0.0
    %91 = vmatpush1.msra.mxu0 0.0
    %92 = vmatprep.subr.mxu0 0.0
    %93 = vmatpush1.msra.mxu0 0.0
    %94 = vmatprep.subr.mxu0 0.0
    %95 = vmatpush1.msra.mxu0 0.0
    %96 = vmatprep.subr.mxu0 0.0
    %97 = vmatpush1.msra.mxu0 0.0
    %98 = vmatprep.subr.mxu0 0.0
    %99 = vmatpush1.msra.mxu0 0.0
    %100 = vmatprep.subr.mxu0 0.0
    %101 = vmatpush1.msra.mxu0 0.0
    %102 = vmatprep.subr.mxu0 0.0
    %103 = vmatpush1.msra.mxu0 0.0
    %104 = vmatprep.subr.mxu0 0.0
    %105 = vmatpush1.msra.mxu0 0.0
    %106 = vmatprep.subr.mxu0 0.0
    %107 = vmatpush1.msra.mxu0 0.0
    %108 = vmatprep.subr.mxu0 0.0
    %109 = vmatpush1.msra.mxu0 0.0
    %110 = vmatprep.subr.mxu0 0.0
    %111 = vmatpush1.msra.mxu0 0.0
    %112 = vmatprep.mubr.f32.mxu0 0.0
    %113 = vmatmul.mubr.f32.gmra.mrb[0].mxu0 %v43
    %v114 = vpop.f32.mrb[0].mxu0
    %v115 = vadd.f32 0.0, %v114
    %v116 = vpop.f32.mrb[0].mxu0
    %117 = vmatprep.mubr.f32.mxu0 0.0
    %118 = vmatmul.mubr.f32.gmra.mrb[0].mxu0 %v46
    %v119 = vpop.f32.mrb[0].mxu0
    %v120 = vadd.f32 0.0, %v119
    %v121 = vpop.f32.mrb[0].mxu0
    %122 = vdwg.mxu0
    %v123 = vld [vmem:[%s1] sm:$0xff]
    %v124 = vld [vmem:[%s1 + $0x8] sm:$0xff]
    %v125 = vld [vmem:[%s4] sm:$0xff]
    %v127 = vsel %vm41, %v123, 0
    %v130 = vsel %vm41, %v124, 0
    %132 = vmatprep.subr.mxu0 0.0
    %133 = vmatpush1.msra.mxu0 %v125
    %134 = vmatprep.subr.mxu0 0.0
    %135 = vmatpush1.msra.mxu0 0.0
    %136 = vmatprep.subr.mxu0 0.0
    %137 = vmatpush1.msra.mxu0 0.0
    %138 = vmatprep.subr.mxu0 0.0
    %139 = vmatpush1.msra.mxu0 0.0
    %140 = vmatprep.subr.mxu0 0.0
    %141 = vmatpush1.msra.mxu0 0.0
    %142 = vmatprep.subr.mxu0 0.0
    %143 = vmatpush1.msra.mxu0 0.0
    %144 = vmatprep.subr.mxu0 0.0
    %145 = vmatpush1.msra.mxu0 0.0
    %146 = vmatprep.subr.mxu0 0.0
    %147 = vmatpush1.msra.mxu0 0.0
    %148 = vmatprep.subr.mxu0 0.0
    %149 = vmatpush1.msra.mxu0 0.0
    %150 = vmatprep.subr.mxu0 0.0
    %151 = vmatpush1.msra.mxu0 0.0
    %152 = vmatprep.subr.mxu0 0.0
    %153 = vmatpush1.msra.mxu0 0.0
    %154 = vmatprep.subr.mxu0 0.0
    %155 = vmatpush1.msra.mxu0 0.0
    %156 = vmatprep.subr.mxu0 0.0
    %157 = vmatpush1.msra.mxu0 0.0
    %158 = vmatprep.subr.mxu0 0.0
    %159 = vmatpush1.msra.mxu0 0.0
    %160 = vmatprep.subr.mxu0 0.0
    %161 = vmatpush1.msra.mxu0 0.0
    %162 = vmatprep.subr.mxu0 0.0
    %163 = vmatpush1.msra.mxu0 0.0
    %164 = vmatprep.subr.mxu0 0.0
    %165 = vmatpush1.msra.mxu0 0.0
    %166 = vmatprep.subr.mxu0 0.0
    %167 = vmatpush1.msra.mxu0 0.0
    %168 = vmatprep.subr.mxu0 0.0
    %169 = vmatpush1.msra.mxu0 0.0
    %170 = vmatprep.subr.mxu0 0.0
    %171 = vmatpush1.msra.mxu0 0.0
    %172 = vmatprep.subr.mxu0 0.0
    %173 = vmatpush1.msra.mxu0 0.0
    %174 = vmatprep.subr.mxu0 0.0
    %175 = vmatpush1.msra.mxu0 0.0
    %176 = vmatprep.subr.mxu0 0.0
    %177 = vmatpush1.msra.mxu0 0.0
    %178 = vmatprep.subr.mxu0 0.0
    %179 = vmatpush1.msra.mxu0 0.0
    %180 = vmatprep.subr.mxu0 0.0
    %181 = vmatpush1.msra.mxu0 0.0
    %182 = vmatprep.subr.mxu0 0.0
    %183 = vmatpush1.msra.mxu0 0.0
    %184 = vmatprep.subr.mxu0 0.0
    %185 = vmatpush1.msra.mxu0 0.0
    %186 = vmatprep.subr.mxu0 0.0
    %187 = vmatpush1.msra.mxu0 0.0
    %188 = vmatprep.subr.mxu0 0.0
    %189 = vmatpush1.msra.mxu0 0.0
    %190 = vmatprep.subr.mxu0 0.0
    %191 = vmatpush1.msra.mxu0 0.0
    %192 = vmatprep.subr.mxu0 0.0
    %193 = vmatpush1.msra.mxu0 0.0
    %194 = vmatprep.subr.mxu0 0.0
    %195 = vmatpush1.msra.mxu0 0.0
    %196 = vmatprep.mubr.f32.mxu0 0.0
    %197 = vmatmul.mubr.f32.gmra.mrb[0].mxu0 %v127
    %v198 = vpop.f32.mrb[0].mxu0
    %v199 = vadd.f32 0.0, %v198
    %v200 = vpop.f32.mrb[0].mxu0
    %201 = vmatprep.mubr.f32.mxu0 0.0
    %202 = vmatmul.mubr.f32.gmra.mrb[0].mxu0 %v130
    %v203 = vpop.f32.mrb[0].mxu0
    %v204 = vadd.f32 0.0, %v203
    %v205 = vpop.f32.mrb[0].mxu0
    %206 = vdwg.mxu0
    %v207 = vld [vmem:[%s5] sm:$0xf]
    %v209 = vsel %vm41, %v207, 0
    %211 = vmatprep.subr.mxu0 0.0
    %212 = vmatpush1.xpose.msra.mxu0 %v43
    %213 = vmatprep.subr.mxu0 0.0
    %214 = vmatpush1.xpose.msra.mxu0 %v46
    %215 = vmatprep.subr.mxu0 0.0
    %216 = vmatpush1.xpose.msra.mxu0 0.0
    %217 = vmatprep.subr.mxu0 0.0
    %218 = vmatpush1.xpose.msra.mxu0 0.0
    %219 = vmatprep.subr.mxu0 0.0
    %220 = vmatpush1.xpose.msra.mxu0 0.0
    %221 = vmatprep.subr.mxu0 0.0
    %222 = vmatpush1.xpose.msra.mxu0 0.0
    %223 = vmatprep.subr.mxu0 0.0
    %224 = vmatpush1.xpose.msra.mxu0 0.0
    %225 = vmatprep.subr.mxu0 0.0
    %226 = vmatpush1.xpose.msra.mxu0 0.0
    %227 = vmatprep.subr.mxu0 0.0
    %228 = vmatpush1.xpose.msra.mxu0 0.0
    %229 = vmatprep.subr.mxu0 0.0
    %230 = vmatpush1.xpose.msra.mxu0 0.0
    %231 = vmatprep.subr.mxu0 0.0
    %232 = vmatpush1.xpose.msra.mxu0 0.0
    %233 = vmatprep.subr.mxu0 0.0
    %234 = vmatpush1.xpose.msra.mxu0 0.0
    %235 = vmatprep.subr.mxu0 0.0
    %236 = vmatpush1.xpose.msra.mxu0 0.0
    %237 = vmatprep.subr.mxu0 0.0
    %238 = vmatpush1.xpose.msra.mxu0 0.0
    %239 = vmatprep.subr.mxu0 0.0
    %240 = vmatpush1.xpose.msra.mxu0 0.0
    %241 = vmatprep.subr.mxu0 0.0
    %242 = vmatpush1.xpose.msra.mxu0 0.0
    %243 = vmatprep.subr.mxu0 0.0
    %244 = vmatpush1.xpose.msra.mxu0 0.0
    %245 = vmatprep.subr.mxu0 0.0
    %246 = vmatpush1.xpose.msra.mxu0 0.0
    %247 = vmatprep.subr.mxu0 0.0
    %248 = vmatpush1.xpose.msra.mxu0 0.0
    %249 = vmatprep.subr.mxu0 0.0
    %250 = vmatpush1.xpose.msra.mxu0 0.0
    %251 = vmatprep.subr.mxu0 0.0
    %252 = vmatpush1.xpose.msra.mxu0 0.0
    %253 = vmatprep.subr.mxu0 0.0
    %254 = vmatpush1.xpose.msra.mxu0 0.0
    %255 = vmatprep.subr.mxu0 0.0
    %256 = vmatpush1.xpose.msra.mxu0 0.0
    %257 = vmatprep.subr.mxu0 0.0
    %258 = vmatpush1.xpose.msra.mxu0 0.0
    %259 = vmatprep.subr.mxu0 0.0
    %260 = vmatpush1.xpose.msra.mxu0 0.0
    %261 = vmatprep.subr.mxu0 0.0
    %262 = vmatpush1.xpose.msra.mxu0 0.0
    %263 = vmatprep.subr.mxu0 0.0
    %264 = vmatpush1.xpose.msra.mxu0 0.0
    %265 = vmatprep.subr.mxu0 0.0
    %266 = vmatpush1.xpose.msra.mxu0 0.0
    %267 = vmatprep.subr.mxu0 0.0
    %268 = vmatpush1.xpose.msra.mxu0 0.0
    %269 = vmatprep.subr.mxu0 0.0
    %270 = vmatpush1.xpose.msra.mxu0 0.0
    %271 = vmatprep.subr.mxu0 0.0
    %272 = vmatpush1.xpose.msra.mxu0 0.0
    %273 = vmatprep.subr.mxu0 0.0
    %274 = vmatpush1.xpose.msra.mxu0 0.0
    %275 = vmatprep.mubr.f32.mxu0 0.0
    %276 = vmatmul.mubr.f32.gmra.mrb[0].mxu0 %v209
    %v277 = vpop.f32.mrb[0].mxu0
    %v278 = vadd.f32 0.0, %v277
    %v279 = vpop.f32.mrb[0].mxu0
    %280 = vdwg.mxu0
    %v281 = vld [vmem:[%s6] sm:$0xf]
    %283 = vset.pattern.permute.xlu0 0
    %284 = vperm.xlu0 %283, %v199
    %v285 = vpop.permute.xlu0 %284
    %288 = vset.pattern.permute.xlu0 0
    %289 = vperm.xlu0 %288, %v204
    %v290 = vpop.permute.xlu0 %289
    %v292 = vlaneseq
    %v293 = vshrl.u32 %v292, 7
    %v294 = vsub.s32 0, %v293
    %v295 = vrot.slane %v278, %v294
    %v296 = vadd.f32 %v285, %v295
    %v297 = vadd.f32 %v290, %v295
    %v298 = vmul.f32 %v296, 0.2
    %v299 = vmul.f32 %v297, 0.2
    %v300 = vmax.f32 %v296, %v298
    %v301 = vmax.f32 %v297, %v299
    %v302 = vadd.f32 %v300, %v38
    %v303 = vadd.f32 %v301, %v39
    %vm304 = vcmask 130048
    %v305 = vsel %vm304, %v302, -inf
    %306 = vmax.xlane.f32.xlu0 %v305
    %v307 = vpop.xlane.xlu0 %306
    %v308 = vsel %vm304, %v303, -inf
    %309 = vmax.xlane.f32.xlu0 %v308
    %v310 = vpop.xlane.xlu0 %309
    %v311 = vsub.f32 %v302, %v307
    %v312 = vsub.f32 %v303, %v310
    %v313 = vmul.f32 %v311, 1.442695
    %v314 = vpow.pop %v313
    %v315 = vmul.f32 %v312, 1.442695
    %v316 = vpow.pop %v315
    %v317 = vsel %vm304, %v314, 0.0
    %318 = vadd.xlane.f32.xlu0 %v317
    %v319 = vpop.xlane.xlu0 %318
    %v320 = vsel %vm304, %v316, 0.0
    %321 = vadd.xlane.f32.xlu0 %v320
    %v322 = vpop.xlane.xlu0 %321
    %v323 = vrcp.pop %v319
    %v324 = vrcp.pop %v322
    %v326 = vsel %vm304, %v314, 0
    %v329 = vsel %vm304, %v316, 0
    %331 = vmatprep.subr.mxu0 0.0
    %332 = vmatpush1.msra.mxu0 %v115
    %333 = vmatprep.subr.mxu0 0.0
    %334 = vmatpush1.msra.mxu0 %v120
    %335 = vmatprep.subr.mxu0 0.0
    %336 = vmatpush1.msra.mxu0 0.0
    %337 = vmatprep.subr.mxu0 0.0
    %338 = vmatpush1.msra.mxu0 0.0
    %339 = vmatprep.subr.mxu0 0.0
    %340 = vmatpush1.msra.mxu0 0.0
    %341 = vmatprep.subr.mxu0 0.0
    %342 = vmatpush1.msra.mxu0 0.0
    %343 = vmatprep.subr.mxu0 0.0
    %344 = vmatpush1.msra.mxu0 0.0
    %345 = vmatprep.subr.mxu0 0.0
    %346 = vmatpush1.msra.mxu0 0.0
    %347 = vmatprep.subr.mxu0 0.0
    %348 = vmatpush1.msra.mxu0 0.0
    %349 = vmatprep.subr.mxu0 0.0
    %350 = vmatpush1.msra.mxu0 0.0
    %351 = vmatprep.subr.mxu0 0.0
    %352 = vmatpush1.msra.mxu0 0.0
    %353 = vmatprep.subr.mxu0 0.0
    %354 = vmatpush1.msra.mxu0 0.0
    %355 = vmatprep.subr.mxu0 0.0
    %356 = vmatpush1.msra.mxu0 0.0
    %357 = vmatprep.subr.mxu0 0.0
    %358 = vmatpush1.msra.mxu0 0.0
    %359 = vmatprep.subr.mxu0 0.0
    %360 = vmatpush1.msra.mxu0 0.0
    %361 = vmatprep.subr.mxu0 0.0
    %362 = vmatpush1.msra.mxu0 0.0
    %363 = vmatprep.subr.mxu0 0.0
    %364 = vmatpush1.msra.mxu0 0.0
    %365 = vmatprep.subr.mxu0 0.0
    %366 = vmatpush1.msra.mxu0 0.0
    %367 = vmatprep.subr.mxu0 0.0
    %368 = vmatpush1.msra.mxu0 0.0
    %369 = vmatprep.subr.mxu0 0.0
    %370 = vmatpush1.msra.mxu0 0.0
    %371 = vmatprep.subr.mxu0 0.0
    %372 = vmatpush1.msra.mxu0 0.0
    %373 = vmatprep.subr.mxu0 0.0
    %374 = vmatpush1.msra.mxu0 0.0
    %375 = vmatprep.subr.mxu0 0.0
    %376 = vmatpush1.msra.mxu0 0.0
    %377 = vmatprep.subr.mxu0 0.0
    %378 = vmatpush1.msra.mxu0 0.0
    %379 = vmatprep.subr.mxu0 0.0
    %380 = vmatpush1.msra.mxu0 0.0
    %381 = vmatprep.subr.mxu0 0.0
    %382 = vmatpush1.msra.mxu0 0.0
    %383 = vmatprep.subr.mxu0 0.0
    %384 = vmatpush1.msra.mxu0 0.0
    %385 = vmatprep.subr.mxu0 0.0
    %386 = vmatpush1.msra.mxu0 0.0
    %387 = vmatprep.subr.mxu0 0.0
    %388 = vmatpush1.msra.mxu0 0.0
    %389 = vmatprep.subr.mxu0 0.0
    %390 = vmatpush1.msra.mxu0 0.0
    %391 = vmatprep.subr.mxu0 0.0
    %392 = vmatpush1.msra.mxu0 0.0
    %393 = vmatprep.subr.mxu0 0.0
    %394 = vmatpush1.msra.mxu0 0.0
    %395 = vmatprep.mubr.f32.mxu0 0.0
    %396 = vmatmul.mubr.f32.gmra.mrb[0].mxu0 %v326
    %v397 = vpop.f32.mrb[0].mxu0
    %v398 = vadd.f32 0.0, %v397
    %v399 = vpop.f32.mrb[0].mxu0
    %400 = vmatprep.mubr.f32.mxu0 0.0
    %401 = vmatmul.mubr.f32.gmra.mrb[0].mxu0 %v329
    %v402 = vpop.f32.mrb[0].mxu0
    %v403 = vadd.f32 0.0, %v402
    %v404 = vpop.f32.mrb[0].mxu0
    %405 = vdwg.mxu0
    %v406 = vlaneseq
    %v407 = vshrl.u32 %v406, 7
    %v408 = vsub.s32 0, %v407
    %v409 = vrot.slane %v281, %v408
    %v410 = vmul.f32 %v323, %v409
    %v411 = vmul.f32 %v324, %v409
    %v412 = vmul.f32 %v398, %v410
    %v413 = vmul.f32 %v403, %v411
    %414 = vset.pattern.permute.xlu0 1
    %415 = vperm.xlu0 %414, %v199
    %v416 = vpop.permute.xlu0 %415
    %418 = vset.pattern.permute.xlu0 1
    %419 = vperm.xlu0 %418, %v204
    %v420 = vpop.permute.xlu0 %419
    %v422 = vlaneseq
    %v423 = vshrl.u32 %v422, 7
    %v424 = vsub.s32 1, %v423
    %v425 = vrot.slane %v278, %v424
    %v426 = vadd.f32 %v416, %v425
    %v427 = vadd.f32 %v420, %v425
    %v428 = vmul.f32 %v426, 0.2
    %v429 = vmul.f32 %v427, 0.2
    %v430 = vmax.f32 %v426, %v428
    %v431 = vmax.f32 %v427, %v429
    %v432 = vadd.f32 %v430, %v38
    %v433 = vadd.f32 %v431, %v39
    %v434 = vsel %vm304, %v432, -inf
    %435 = vmax.xlane.f32.xlu0 %v434
    %v436 = vpop.xlane.xlu0 %435
    %v437 = vsel %vm304, %v433, -inf
    %438 = vmax.xlane.f32.xlu0 %v437
    %v439 = vpop.xlane.xlu0 %438
    %v440 = vsub.f32 %v432, %v436
    %v441 = vsub.f32 %v433, %v439
    %v442 = vmul.f32 %v440, 1.442695
    %v443 = vpow.pop %v442
    %v444 = vmul.f32 %v441, 1.442695
    %v445 = vpow.pop %v444
    %v446 = vsel %vm304, %v443, 0.0
    %447 = vadd.xlane.f32.xlu0 %v446
    %v448 = vpop.xlane.xlu0 %447
    %v449 = vsel %vm304, %v445, 0.0
    %450 = vadd.xlane.f32.xlu0 %v449
    %v451 = vpop.xlane.xlu0 %450
    %v452 = vrcp.pop %v448
    %v453 = vrcp.pop %v451
    %v455 = vsel %vm304, %v443, 0
    %v458 = vsel %vm304, %v445, 0
    %460 = vmatprep.subr.mxu0 0.0
    %461 = vmatpush1.msra.mxu0 %v115
    %462 = vmatprep.subr.mxu0 0.0
    %463 = vmatpush1.msra.mxu0 %v120
    %464 = vmatprep.subr.mxu0 0.0
    %465 = vmatpush1.msra.mxu0 0.0
    %466 = vmatprep.subr.mxu0 0.0
    %467 = vmatpush1.msra.mxu0 0.0
    %468 = vmatprep.subr.mxu0 0.0
    %469 = vmatpush1.msra.mxu0 0.0
    %470 = vmatprep.subr.mxu0 0.0
    %471 = vmatpush1.msra.mxu0 0.0
    %472 = vmatprep.subr.mxu0 0.0
    %473 = vmatpush1.msra.mxu0 0.0
    %474 = vmatprep.subr.mxu0 0.0
    %475 = vmatpush1.msra.mxu0 0.0
    %476 = vmatprep.subr.mxu0 0.0
    %477 = vmatpush1.msra.mxu0 0.0
    %478 = vmatprep.subr.mxu0 0.0
    %479 = vmatpush1.msra.mxu0 0.0
    %480 = vmatprep.subr.mxu0 0.0
    %481 = vmatpush1.msra.mxu0 0.0
    %482 = vmatprep.subr.mxu0 0.0
    %483 = vmatpush1.msra.mxu0 0.0
    %484 = vmatprep.subr.mxu0 0.0
    %485 = vmatpush1.msra.mxu0 0.0
    %486 = vmatprep.subr.mxu0 0.0
    %487 = vmatpush1.msra.mxu0 0.0
    %488 = vmatprep.subr.mxu0 0.0
    %489 = vmatpush1.msra.mxu0 0.0
    %490 = vmatprep.subr.mxu0 0.0
    %491 = vmatpush1.msra.mxu0 0.0
    %492 = vmatprep.subr.mxu0 0.0
    %493 = vmatpush1.msra.mxu0 0.0
    %494 = vmatprep.subr.mxu0 0.0
    %495 = vmatpush1.msra.mxu0 0.0
    %496 = vmatprep.subr.mxu0 0.0
    %497 = vmatpush1.msra.mxu0 0.0
    %498 = vmatprep.subr.mxu0 0.0
    %499 = vmatpush1.msra.mxu0 0.0
    %500 = vmatprep.subr.mxu0 0.0
    %501 = vmatpush1.msra.mxu0 0.0
    %502 = vmatprep.subr.mxu0 0.0
    %503 = vmatpush1.msra.mxu0 0.0
    %504 = vmatprep.subr.mxu0 0.0
    %505 = vmatpush1.msra.mxu0 0.0
    %506 = vmatprep.subr.mxu0 0.0
    %507 = vmatpush1.msra.mxu0 0.0
    %508 = vmatprep.subr.mxu0 0.0
    %509 = vmatpush1.msra.mxu0 0.0
    %510 = vmatprep.subr.mxu0 0.0
    %511 = vmatpush1.msra.mxu0 0.0
    %512 = vmatprep.subr.mxu0 0.0
    %513 = vmatpush1.msra.mxu0 0.0
    %514 = vmatprep.subr.mxu0 0.0
    %515 = vmatpush1.msra.mxu0 0.0
    %516 = vmatprep.subr.mxu0 0.0
    %517 = vmatpush1.msra.mxu0 0.0
    %518 = vmatprep.subr.mxu0 0.0
    %519 = vmatpush1.msra.mxu0 0.0
    %520 = vmatprep.subr.mxu0 0.0
    %521 = vmatpush1.msra.mxu0 0.0
    %522 = vmatprep.subr.mxu0 0.0
    %523 = vmatpush1.msra.mxu0 0.0
    %524 = vmatprep.mubr.f32.mxu0 0.0
    %525 = vmatmul.mubr.f32.gmra.mrb[0].mxu0 %v455
    %v526 = vpop.f32.mrb[0].mxu0
    %v527 = vadd.f32 0.0, %v526
    %v528 = vpop.f32.mrb[0].mxu0
    %529 = vmatprep.mubr.f32.mxu0 0.0
    %530 = vmatmul.mubr.f32.gmra.mrb[0].mxu0 %v458
    %v531 = vpop.f32.mrb[0].mxu0
    %v532 = vadd.f32 0.0, %v531
    %v533 = vpop.f32.mrb[0].mxu0
    %534 = vdwg.mxu0
    %v535 = vlaneseq
    %v536 = vshrl.u32 %v535, 7
    %v537 = vsub.s32 1, %v536
    %v538 = vrot.slane %v281, %v537
    %v539 = vmul.f32 %v452, %v538
    %v540 = vmul.f32 %v453, %v538
    %v541 = vmul.f32 %v527, %v539
    %v542 = vmul.f32 %v532, %v540
    %v543 = vadd.f32 %v412, %v541
    %v544 = vadd.f32 %v413, %v542
    %545 = vset.pattern.permute.xlu0 2
    %546 = vperm.xlu0 %545, %v199
    %v547 = vpop.permute.xlu0 %546
    %549 = vset.pattern.permute.xlu0 2
    %550 = vperm.xlu0 %549, %v204
    %v551 = vpop.permute.xlu0 %550
    %v553 = vlaneseq
    %v554 = vshrl.u32 %v553, 7
    %v555 = vsub.s32 2, %v554
    %v556 = vrot.slane %v278, %v555
    %v557 = vadd.f32 %v547, %v556
    %v558 = vadd.f32 %v551, %v556
    %v559 = vmul.f32 %v557, 0.2
    %v560 = vmul.f32 %v558, 0.2
    %v561 = vmax.f32 %v557, %v559
    %v562 = vmax.f32 %v558, %v560
    %v563 = vadd.f32 %v561, %v38
    %v564 = vadd.f32 %v562, %v39
    %v565 = vsel %vm304, %v563, -inf
    %566 = vmax.xlane.f32.xlu0 %v565
    %v567 = vpop.xlane.xlu0 %566
    %v568 = vsel %vm304, %v564, -inf
    %569 = vmax.xlane.f32.xlu0 %v568
    %v570 = vpop.xlane.xlu0 %569
    %v571 = vsub.f32 %v563, %v567
    %v572 = vsub.f32 %v564, %v570
    %v573 = vmul.f32 %v571, 1.442695
    %v574 = vpow.pop %v573
    %v575 = vmul.f32 %v572, 1.442695
    %v576 = vpow.pop %v575
    %v577 = vsel %vm304, %v574, 0.0
    %578 = vadd.xlane.f32.xlu0 %v577
    %v579 = vpop.xlane.xlu0 %578
    %v580 = vsel %vm304, %v576, 0.0
    %581 = vadd.xlane.f32.xlu0 %v580
    %v582 = vpop.xlane.xlu0 %581
    %v583 = vrcp.pop %v579
    %v584 = vrcp.pop %v582
    %v586 = vsel %vm304, %v574, 0
    %v589 = vsel %vm304, %v576, 0
    %591 = vmatprep.subr.mxu0 0.0
    %592 = vmatpush1.msra.mxu0 %v115
    %593 = vmatprep.subr.mxu0 0.0
    %594 = vmatpush1.msra.mxu0 %v120
    %595 = vmatprep.subr.mxu0 0.0
    %596 = vmatpush1.msra.mxu0 0.0
    %597 = vmatprep.subr.mxu0 0.0
    %598 = vmatpush1.msra.mxu0 0.0
    %599 = vmatprep.subr.mxu0 0.0
    %600 = vmatpush1.msra.mxu0 0.0
    %601 = vmatprep.subr.mxu0 0.0
    %602 = vmatpush1.msra.mxu0 0.0
    %603 = vmatprep.subr.mxu0 0.0
    %604 = vmatpush1.msra.mxu0 0.0
    %605 = vmatprep.subr.mxu0 0.0
    %606 = vmatpush1.msra.mxu0 0.0
    %607 = vmatprep.subr.mxu0 0.0
    %608 = vmatpush1.msra.mxu0 0.0
    %609 = vmatprep.subr.mxu0 0.0
    %610 = vmatpush1.msra.mxu0 0.0
    %611 = vmatprep.subr.mxu0 0.0
    %612 = vmatpush1.msra.mxu0 0.0
    %613 = vmatprep.subr.mxu0 0.0
    %614 = vmatpush1.msra.mxu0 0.0
    %615 = vmatprep.subr.mxu0 0.0
    %616 = vmatpush1.msra.mxu0 0.0
    %617 = vmatprep.subr.mxu0 0.0
    %618 = vmatpush1.msra.mxu0 0.0
    %619 = vmatprep.subr.mxu0 0.0
    %620 = vmatpush1.msra.mxu0 0.0
    %621 = vmatprep.subr.mxu0 0.0
    %622 = vmatpush1.msra.mxu0 0.0
    %623 = vmatprep.subr.mxu0 0.0
    %624 = vmatpush1.msra.mxu0 0.0
    %625 = vmatprep.subr.mxu0 0.0
    %626 = vmatpush1.msra.mxu0 0.0
    %627 = vmatprep.subr.mxu0 0.0
    %628 = vmatpush1.msra.mxu0 0.0
    %629 = vmatprep.subr.mxu0 0.0
    %630 = vmatpush1.msra.mxu0 0.0
    %631 = vmatprep.subr.mxu0 0.0
    %632 = vmatpush1.msra.mxu0 0.0
    %633 = vmatprep.subr.mxu0 0.0
    %634 = vmatpush1.msra.mxu0 0.0
    %635 = vmatprep.subr.mxu0 0.0
    %636 = vmatpush1.msra.mxu0 0.0
    %637 = vmatprep.subr.mxu0 0.0
    %638 = vmatpush1.msra.mxu0 0.0
    %639 = vmatprep.subr.mxu0 0.0
    %640 = vmatpush1.msra.mxu0 0.0
    %641 = vmatprep.subr.mxu0 0.0
    %642 = vmatpush1.msra.mxu0 0.0
    %643 = vmatprep.subr.mxu0 0.0
    %644 = vmatpush1.msra.mxu0 0.0
    %645 = vmatprep.subr.mxu0 0.0
    %646 = vmatpush1.msra.mxu0 0.0
    %647 = vmatprep.subr.mxu0 0.0
    %648 = vmatpush1.msra.mxu0 0.0
    %649 = vmatprep.subr.mxu0 0.0
    %650 = vmatpush1.msra.mxu0 0.0
    %651 = vmatprep.subr.mxu0 0.0
    %652 = vmatpush1.msra.mxu0 0.0
    %653 = vmatprep.subr.mxu0 0.0
    %654 = vmatpush1.msra.mxu0 0.0
    %655 = vmatprep.mubr.f32.mxu0 0.0
    %656 = vmatmul.mubr.f32.gmra.mrb[0].mxu0 %v586
    %v657 = vpop.f32.mrb[0].mxu0
    %v658 = vadd.f32 0.0, %v657
    %v659 = vpop.f32.mrb[0].mxu0
    %660 = vmatprep.mubr.f32.mxu0 0.0
    %661 = vmatmul.mubr.f32.gmra.mrb[0].mxu0 %v589
    %v662 = vpop.f32.mrb[0].mxu0
    %v663 = vadd.f32 0.0, %v662
    %v664 = vpop.f32.mrb[0].mxu0
    %665 = vdwg.mxu0
    %v666 = vlaneseq
    %v667 = vshrl.u32 %v666, 7
    %v668 = vsub.s32 2, %v667
    %v669 = vrot.slane %v281, %v668
    %v670 = vmul.f32 %v583, %v669
    %v671 = vmul.f32 %v584, %v669
    %v672 = vmul.f32 %v658, %v670
    %v673 = vmul.f32 %v663, %v671
    %v674 = vadd.f32 %v543, %v672
    %v675 = vadd.f32 %v544, %v673
    %676 = vset.pattern.permute.xlu0 3
    %677 = vperm.xlu0 %676, %v199
    %v678 = vpop.permute.xlu0 %677
    %680 = vset.pattern.permute.xlu0 3
    %681 = vperm.xlu0 %680, %v204
    %v682 = vpop.permute.xlu0 %681
    %v684 = vlaneseq
    %v685 = vshrl.u32 %v684, 7
    %v686 = vsub.s32 3, %v685
    %v687 = vrot.slane %v278, %v686
    %v688 = vadd.f32 %v678, %v687
    %v689 = vadd.f32 %v682, %v687
    %v690 = vmul.f32 %v688, 0.2
    %v691 = vmul.f32 %v689, 0.2
    %v692 = vmax.f32 %v688, %v690
    %v693 = vmax.f32 %v689, %v691
    %v694 = vadd.f32 %v692, %v38
    %v695 = vadd.f32 %v693, %v39
    %v696 = vsel %vm304, %v694, -inf
    %697 = vmax.xlane.f32.xlu0 %v696
    %v698 = vpop.xlane.xlu0 %697
    %v699 = vsel %vm304, %v695, -inf
    %700 = vmax.xlane.f32.xlu0 %v699
    %v701 = vpop.xlane.xlu0 %700
    %v702 = vsub.f32 %v694, %v698
    %v703 = vsub.f32 %v695, %v701
    %v704 = vmul.f32 %v702, 1.442695
    %v705 = vpow.pop %v704
    %v706 = vmul.f32 %v703, 1.442695
    %v707 = vpow.pop %v706
    %v708 = vsel %vm304, %v705, 0.0
    %709 = vadd.xlane.f32.xlu0 %v708
    %v710 = vpop.xlane.xlu0 %709
    %v711 = vsel %vm304, %v707, 0.0
    %712 = vadd.xlane.f32.xlu0 %v711
    %v713 = vpop.xlane.xlu0 %712
    %v714 = vrcp.pop %v710
    %v715 = vrcp.pop %v713
    %v717 = vsel %vm304, %v705, 0
    %v720 = vsel %vm304, %v707, 0
    %722 = vmatprep.subr.mxu0 0.0
    %723 = vmatpush1.msra.mxu0 %v115
    %724 = vmatprep.subr.mxu0 0.0
    %725 = vmatpush1.msra.mxu0 %v120
    %726 = vmatprep.subr.mxu0 0.0
    %727 = vmatpush1.msra.mxu0 0.0
    %728 = vmatprep.subr.mxu0 0.0
    %729 = vmatpush1.msra.mxu0 0.0
    %730 = vmatprep.subr.mxu0 0.0
    %731 = vmatpush1.msra.mxu0 0.0
    %732 = vmatprep.subr.mxu0 0.0
    %733 = vmatpush1.msra.mxu0 0.0
    %734 = vmatprep.subr.mxu0 0.0
    %735 = vmatpush1.msra.mxu0 0.0
    %736 = vmatprep.subr.mxu0 0.0
    %737 = vmatpush1.msra.mxu0 0.0
    %738 = vmatprep.subr.mxu0 0.0
    %739 = vmatpush1.msra.mxu0 0.0
    %740 = vmatprep.subr.mxu0 0.0
    %741 = vmatpush1.msra.mxu0 0.0
    %742 = vmatprep.subr.mxu0 0.0
    %743 = vmatpush1.msra.mxu0 0.0
    %744 = vmatprep.subr.mxu0 0.0
    %745 = vmatpush1.msra.mxu0 0.0
    %746 = vmatprep.subr.mxu0 0.0
    %747 = vmatpush1.msra.mxu0 0.0
    %748 = vmatprep.subr.mxu0 0.0
    %749 = vmatpush1.msra.mxu0 0.0
    %750 = vmatprep.subr.mxu0 0.0
    %751 = vmatpush1.msra.mxu0 0.0
    %752 = vmatprep.subr.mxu0 0.0
    %753 = vmatpush1.msra.mxu0 0.0
    %754 = vmatprep.subr.mxu0 0.0
    %755 = vmatpush1.msra.mxu0 0.0
    %756 = vmatprep.subr.mxu0 0.0
    %757 = vmatpush1.msra.mxu0 0.0
    %758 = vmatprep.subr.mxu0 0.0
    %759 = vmatpush1.msra.mxu0 0.0
    %760 = vmatprep.subr.mxu0 0.0
    %761 = vmatpush1.msra.mxu0 0.0
    %762 = vmatprep.subr.mxu0 0.0
    %763 = vmatpush1.msra.mxu0 0.0
    %764 = vmatprep.subr.mxu0 0.0
    %765 = vmatpush1.msra.mxu0 0.0
    %766 = vmatprep.subr.mxu0 0.0
    %767 = vmatpush1.msra.mxu0 0.0
    %768 = vmatprep.subr.mxu0 0.0
    %769 = vmatpush1.msra.mxu0 0.0
    %770 = vmatprep.subr.mxu0 0.0
    %771 = vmatpush1.msra.mxu0 0.0
    %772 = vmatprep.subr.mxu0 0.0
    %773 = vmatpush1.msra.mxu0 0.0
    %774 = vmatprep.subr.mxu0 0.0
    %775 = vmatpush1.msra.mxu0 0.0
    %776 = vmatprep.subr.mxu0 0.0
    %777 = vmatpush1.msra.mxu0 0.0
    %778 = vmatprep.subr.mxu0 0.0
    %779 = vmatpush1.msra.mxu0 0.0
    %780 = vmatprep.subr.mxu0 0.0
    %781 = vmatpush1.msra.mxu0 0.0
    %782 = vmatprep.subr.mxu0 0.0
    %783 = vmatpush1.msra.mxu0 0.0
    %784 = vmatprep.subr.mxu0 0.0
    %785 = vmatpush1.msra.mxu0 0.0
    %786 = vmatprep.mubr.f32.mxu0 0.0
    %787 = vmatmul.mubr.f32.gmra.mrb[0].mxu0 %v717
    %v788 = vpop.f32.mrb[0].mxu0
    %v789 = vadd.f32 0.0, %v788
    %v790 = vpop.f32.mrb[0].mxu0
    %791 = vmatprep.mubr.f32.mxu0 0.0
    %792 = vmatmul.mubr.f32.gmra.mrb[0].mxu0 %v720
    %v793 = vpop.f32.mrb[0].mxu0
    %v794 = vadd.f32 0.0, %v793
    %v795 = vpop.f32.mrb[0].mxu0
    %796 = vdwg.mxu0
    %v797 = vlaneseq
    %v798 = vshrl.u32 %v797, 7
    %v799 = vsub.s32 3, %v798
    %v800 = vrot.slane %v281, %v799
    %v801 = vmul.f32 %v714, %v800
    %v802 = vmul.f32 %v715, %v800
    %v803 = vmul.f32 %v789, %v801
    %v804 = vmul.f32 %v794, %v802
    %v805 = vadd.f32 %v674, %v803
    %v806 = vadd.f32 %v675, %v804
    %v807 = vld [vmem:[%s7] sm:$0x1]
    %v809 = vlaneseq
    %v810 = vshrl.u32 %v809, 7
    %v811 = vsub.s32 0, %v810
    %v812 = vrot.slane %v807, %v811
    %v814 = vadd.f32 %v805, %v812
    %v815 = vadd.f32 %v806, %v812
    %v816 = vmax.f32 %v814, 0.0
    %v817 = vmax.f32 %v815, 0.0
    %vm818 = vcmask 261120
    %819 = vst.msk [vmem:[#allocation2] sm:$0xff] %vm818, %v816
    %820 = vst.msk [vmem:[#allocation2 + $0x8] sm:$0xff] %vm818, %v817
    // Predicated region
    $region34: #{tpu_custom_call.1} parent=1 // pred_check
      _
    $region35: #{tpu_custom_call.1} parent=1 // pred_check_branch
      %822 = sbr.rel (0) target = $region37
    $region36: #{tpu_custom_call.1} parent=1 // pred_region
      %s824 = ssub.s32 256, 256
      %825 = vsyncadd [#allocation3], %s824
      %s826 = sshll.u32 [#allocation2], 4
      %s827 = int_to_ptr.vmem [resolvable:$true] %s826
      %832 = dma.vmem_to_hbm [thread:$0]  %s827, 256, %s8, [#allocation3], 128, 128, 8
    $region37: #{tpu_custom_call.1} parent=1 // pred_fallthru
      _
    // Predicated region
    $region38: #{tpu_custom_call.1} parent=1 // pred_check
      _
    $region39: #{tpu_custom_call.1} parent=1 // pred_check_branch
      %834 = sbr.rel (0) target = $region41
    $region40: #{tpu_custom_call.1} parent=1 // pred_region
      %835 = dma.done [#allocation3], 256
    $region41: #{tpu_custom_call.1} parent=1 // pred_fallthru
      _
    %836 = vsyncpa [#allocation3], 1

</llo_original>
